<compile_context>
chip_gen: v6e
topology: v6e:2x2x1
jax: 0.10.0
libtpu: 0.0.40
codegen_flags: <defaults>
</compile_context>

<pallas_src>
import math
from functools import partial

import jax
import jax.numpy as jnp
from jax.experimental import pallas as pl
from jax.experimental.pallas import tpu as pltpu

_VMEM_LIMIT = 48 * 1024 * 1024  # < 64 MiB physical on v7x, fine on v5e/v6e


def _pick_tile(dim, candidates, align):
    """Largest candidate that divides `dim` and is `align`-aligned, else full dim."""
    for c in candidates:
        if c <= dim and dim % c == 0 and c % align == 0:
            return c
    return dim


# --------------------------- tiled linear kernel ----------------------------

def _linear_kernel(x_ref, w_ref, o_ref, acc_ref):
    # x block: (tm, tk); w block: (tn, tk)  [nn.Linear layout]; out: (tm, tn).
    @pl.when(pl.program_id(2) == 0)
    def _init():
        acc_ref[...] = jnp.zeros_like(acc_ref)

    acc_ref[...] += jax.lax.dot_general(
        x_ref[...], w_ref[...], (((1,), (1,)), ((), ())),
        preferred_element_type=jnp.float32)

    @pl.when(pl.program_id(2) == pl.num_programs(2) - 1)
    def _store():
        o_ref[...] = acc_ref[...].astype(o_ref.dtype)


def pallas_linear(x, w, *, blocks=None):
    """y = x @ w.T   with x: (M, K), w: (N, K) (nn.Linear weight layout)."""
    M, K = x.shape
    N, K2 = w.shape
    assert K == K2
    if blocks is None:
        tm, tn, tk = 256, 256, 512
    else:
        tm, tn, tk = blocks
    tm = _pick_tile(M, (tm, 128, 64, 32, 16, 8), 8)
    tn = _pick_tile(N, (tn, 256, 128), 128)
    tk = _pick_tile(K, (tk, 256, 128), 128)

    return pl.pallas_call(
        _linear_kernel,
        out_shape=jax.ShapeDtypeStruct((M, N), x.dtype),
        grid=(M // tm, N // tn, K // tk),
        in_specs=[
            pl.BlockSpec((tm, tk), lambda i, j, k: (i, k)),
            pl.BlockSpec((tn, tk), lambda i, j, k: (j, k)),
        ],
        out_specs=pl.BlockSpec((tm, tn), lambda i, j, k: (i, j)),
        scratch_shapes=[pltpu.VMEM((tm, tn), jnp.float32)],
        compiler_params=pltpu.CompilerParams(
            dimension_semantics=("parallel", "parallel", "arbitrary"),
            vmem_limit_bytes=_VMEM_LIMIT,
        ),
    )(x, w)


# ------------------------ flash attention (with RoPE) -----------------------

def _flash_kernel(q_ref, k_ref, v_ref, cq_ref, sq_ref, ck_ref, sk_ref,
                  o_ref, m_sc, l_sc, acc_sc, qr_sc,
                  *, scale, tq, tk, h2):
    qi = pl.program_id(2)
    ki = pl.program_id(3)

    @pl.when(ki == 0)
    def _init():
        m_sc[...] = jnp.full_like(m_sc, -jnp.inf)
        l_sc[...] = jnp.zeros_like(l_sc)
        acc_sc[...] = jnp.zeros_like(acc_sc)
        # RoPE on the q tile (evens-then-odds head layout): lane roll + FMAs.
        q = q_ref[0]                                            # (tq, hs)
        q_r = q * cq_ref[...] + pltpu.roll(q, shift=h2, axis=1) * sq_ref[...]
        qr_sc[...] = q_r.astype(qr_sc.dtype)

    # Causal skip: this kv tile contributes iff its first column <= last q row.
    @pl.when(ki * tk <= qi * tq + (tq - 1))
    def _compute():
        k = k_ref[0]                                            # (tk, hs)
        k_r = k * ck_ref[...] + pltpu.roll(k, shift=h2, axis=1) * sk_ref[...]

        # scores (tq, tk): native-dtype MXU inputs, f32 accumulation.
        sc = jax.lax.dot_general(
            qr_sc[...], k_r.astype(qr_sc.dtype), (((1,), (1,)), ((), ())),
            preferred_element_type=jnp.float32) * scale

        # in-kernel causal mask (large finite negative avoids -inf - -inf NaNs)
        row = jax.lax.broadcasted_iota(jnp.int32, (tq, tk), 0) + qi * tq
        col = jax.lax.broadcasted_iota(jnp.int32, (tq, tk), 1) + ki * tk
        sc = jnp.where(row >= col, sc, -1e30)

        m_prev = m_sc[...]
        m_new = jnp.maximum(m_prev, jnp.max(sc, axis=-1, keepdims=True))
        alpha = jnp.exp(m_prev - m_new)
        p = jnp.exp(sc - m_new)
        l_sc[...] = alpha * l_sc[...] + jnp.sum(p, axis=-1, keepdims=True)
        acc_sc[...] = alpha * acc_sc[...] + jax.lax.dot_general(
            p.astype(v_ref.dtype), v_ref[0], (((1,), (0,)), ((), ())),
            preferred_element_type=jnp.float32)
        m_sc[...] = m_new

    @pl.when(ki == pl.num_programs(3) - 1)
    def _finalize():
        inv_l = pl.reciprocal(l_sc[...], approx=True)
        o_ref[0] = (acc_sc[...] * inv_l).astype(o_ref.dtype)


def pallas_flash_attention(qkv, cos_full, sin_full, *, n_head, blocks=None):
    """qkv: (B, T, 3C) fused projection (q/k heads in evens-then-odds layout).

    cos_full/sin_full: (T, hs) rope tables (sin already sign-split [-s | s]).
    Returns y: (B, T, C) — attention output already in (B, T, C) layout.
    """
    B, T, C3 = qkv.shape
    C = C3 // 3
    hs = C // n_head
    h2 = hs // 2
    assert hs % 128 == 0, "head_size must be a multiple of 128"

    if blocks is None:
        tq = tk = 128
    else:
        tq, tk = blocks
    tq = _pick_tile(T, (tq, 64, 32, 16, 8), 8)
    tk = _pick_tile(T, (tk, 64, 32, 16, 8), 8)

    kern = partial(_flash_kernel, scale=1.0 / math.sqrt(hs), tq=tq, tk=tk, h2=h2)

    return pl.pallas_call(
        kern,
        out_shape=jax.ShapeDtypeStruct((B, T, C), qkv.dtype),
        grid=(B, n_head, T // tq, T // tk),
        in_specs=[
            # q / k / v head tiles read straight out of the fused qkv projection.
            pl.BlockSpec((1, tq, hs), lambda b, h, qi, ki: (b, qi, h)),
            pl.BlockSpec((1, tk, hs), lambda b, h, qi, ki: (b, ki, n_head + h)),
            pl.BlockSpec((1, tk, hs), lambda b, h, qi, ki: (b, ki, 2 * n_head + h)),
            # rope tables for the q tile and the k tile.
            pl.BlockSpec((tq, hs), lambda b, h, qi, ki: (qi, 0)),
            pl.BlockSpec((tq, hs), lambda b, h, qi, ki: (qi, 0)),
            pl.BlockSpec((tk, hs), lambda b, h, qi, ki: (ki, 0)),
            pl.BlockSpec((tk, hs), lambda b, h, qi, ki: (ki, 0)),
        ],
        out_specs=pl.BlockSpec((1, tq, hs), lambda b, h, qi, ki: (b, qi, h)),
        scratch_shapes=[
            pltpu.VMEM((tq, 1), jnp.float32),    # running max m
            pltpu.VMEM((tq, 1), jnp.float32),    # running sum l
            pltpu.VMEM((tq, hs), jnp.float32),   # output accumulator
            pltpu.VMEM((tq, hs), qkv.dtype),     # roped q tile (reused across kv)
        ],
        compiler_params=pltpu.CompilerParams(
            dimension_semantics=("parallel", "parallel", "parallel", "arbitrary"),
            vmem_limit_bytes=_VMEM_LIMIT,
        ),
    )(qkv, qkv, qkv, cos_full, sin_full, cos_full, sin_full)


# ------------------------------- glue (JAX) ---------------------------------

def _deinterleave_qk_rows(w_attn, n_head, hs):
    """Permute q/k rows of the fused qkv weight so each head's rotary pair dims
    are laid out as [even dims | odd dims].  Scores are invariant to this common
    permutation of q and k; v rows untouched.  (Would be done once at load time.)
    """
    C = n_head * hs
    within = jnp.concatenate([jnp.arange(0, hs, 2), jnp.arange(1, hs, 2)])
    per_head = (jnp.arange(n_head)[:, None] * hs + within[None, :]).reshape(-1)
    perm = jnp.concatenate([per_head, C + per_head, 2 * C + jnp.arange(C)])
    return w_attn[perm]


def causal_self_attention(x, w_attn, w_proj, rope, n_head,
                          *, mm_block=None, attn_block=None):
    """Mirrors CausalSelfAttention.forward with kv_cache=None / input_pos=None.

    x:      (B, T, C)
    w_attn: (3C, C)   nn.Linear(C, 3C, bias=False).weight
    w_proj: (C, C)    nn.Linear(C, C,  bias=False).weight
    rope:   (>=T, hs//2, 2) rope cache (cos, sin)
    returns (y, None) with y: (B, T, C)
    """
    B, T, C = x.shape
    hs = C // n_head
    assert hs % 128 == 0, "head_size must be a multiple of 128 (7B/13B/30B/65B)"

    # One-time weight prep for in-kernel RoPE (evens-then-odds head layout).
    w_attn_p = _deinterleave_qk_rows(w_attn, n_head, hs)

    # Fused qkv projection: (B*T, C) x (3C, C)^T — tiled Pallas matmul.
    qkv = pallas_linear(x.reshape(B * T, C), w_attn_p, blocks=mm_block)
    qkv = qkv.reshape(B, T, 3 * C)

    # Rope tables in the deinterleaved layout: cos -> [c | c], sin -> [-s | s].
    cos = rope[:T, :, 0]
    sin = rope[:T, :, 1]
    cos_full = jnp.concatenate([cos, cos], axis=-1).astype(x.dtype)   # (T, hs)
    sin_full = jnp.concatenate([-sin, sin], axis=-1).astype(x.dtype)  # (T, hs)

    # Flash attention with fused RoPE; reads per-head tiles from qkv directly
    # and writes y already in (B, T, C) layout (no transposes / splits).
    y = pallas_flash_attention(qkv, cos_full, sin_full,
                               n_head=n_head, blocks=attn_block)

    # Output projection.
    y = pallas_linear(y.reshape(B * T, C), w_proj, blocks=mm_block)
    return y.reshape(B, T, C), None


# -------------------------------- reference ---------------------------------

def apply_rope_ref(x, rope_cache):
    B, T, H, hs = x.shape
    rc = rope_cache[:T].reshape(1, T, 1, hs // 2, 2)
    xs = x.astype(jnp.float32).reshape(B, T, H, hs // 2, 2)
    x0, x1 = xs[..., 0], xs[..., 1]
    c, s = rc[..., 0], rc[..., 1]
    out = jnp.stack([x0 * c - x1 * s, x1 * c + x0 * s], axis=-1)
    return out.reshape(B, T, H, hs).astype(x.dtype)


def reference_forward(x, w_attn, w_proj, rope_cache, n_head):
    B, T, C = x.shape
    hs = C // n_head
    qkv = x @ w_attn.T
    q, k, v = jnp.split(qkv, 3, axis=2)
    q = apply_rope_ref(q.reshape(B, T, n_head, hs), rope_cache)
    k = apply_rope_ref(k.reshape(B, T, n_head, hs), rope_cache)
    v = v.reshape(B, T, n_head, hs)
    q, k, v = (t.transpose(0, 2, 1, 3) for t in (q, k, v))
    s = jnp.einsum("bhqd,bhkd->bhqk", q, k) / math.sqrt(hs)
    mask = jnp.tril(jnp.ones((T, T), dtype=bool))
    s = jnp.where(mask[None, None], s, -jnp.inf)
    p = jax.nn.softmax(s, axis=-1)
    y = jnp.einsum("bhqk,bhkd->bhqd", p, v)
    y = y.transpose(0, 2, 1, 3).reshape(B, T, C)
    return y @ w_proj.T


# ----------------------------------- main ------------------------------------

if __name__ == "__main__":
    # Small but TPU-friendly shapes: head_size = 128 (as in real LLaMA configs).
    B, T, C, n_head = 2, 16, 256, 2
    hs = C // n_head

    key = jax.random.PRNGKey(0)
    kx, ka, kp = jax.random.split(key, 3)
    x = jax.random.normal(kx, (B, T, C), dtype=jnp.float32)
    w_attn = 0.02 * jax.random.normal(ka, (3 * C, C), dtype=jnp.float32)
    w_proj = 0.02 * jax.random.normal(kp, (C, C), dtype=jnp.float32)

    # rope cache (T, hs//2, 2) exactly as build_rope_cache (base=1000).
    theta = 1.0 / (1000.0 ** (jnp.arange(1, hs, 2, dtype=jnp.float32) / hs))
    idx_theta = jnp.outer(jnp.arange(T, dtype=jnp.float32), theta)
    rope_cache = jnp.stack([jnp.cos(idx_theta), jnp.sin(idx_theta)], axis=-1)

    # Small block overrides so the demo exercises M/N tiling, K accumulation,
    # multi-tile online softmax and the causal kv-tile skip.
    y, kv = causal_self_attention(
        x, w_attn, w_proj, rope_cache, n_head,
        mm_block=(16, 128, 128),
        attn_block=(8, 8),
    )
    y = jax.block_until_ready(y)

    y_ref = reference_forward(x, w_attn, w_proj, rope_cache, n_head)
    assert y.shape == (B, T, C)
    err = float(jnp.max(jnp.abs(y - y_ref)))
    # tolerance accounts for pl.reciprocal(approx=True) in the softmax epilogue
    assert err < 2e-3, f"max abs err {err}"
    print("KERNEL_OK")
</pallas_src>

<mosaic_0001>
module attributes {stable_mosaic.version = 11 : i64} {
  func.func @_linear_kernel(%arg0: i32, %arg1: i32, %arg2: i32, %arg3: memref<16x128xf32, #tpu.memory_space<vmem>>, %arg4: memref<128x128xf32, #tpu.memory_space<vmem>>, %arg5: memref<16x128xf32, #tpu.memory_space<vmem>>, %arg6: memref<16x128xf32, #tpu.memory_space<vmem>>) attributes {dimension_semantics = [#tpu.dimension_semantics<parallel>, #tpu.dimension_semantics<parallel>, #tpu.dimension_semantics<arbitrary>], iteration_bounds = array<i64: 2, 6, 2>, scalar_prefetch = 0 : i64, scratch_operands = 1 : i64, tpu.core_type = #tpu.core_type<tc>, window_params = [{transform_indices = @transform_0, window_bounds = array<i64: 16, 128>}, {transform_indices = @transform_1, window_bounds = array<i64: 128, 128>}, {transform_indices = @transform_2, window_bounds = array<i64: 16, 128>}]} {
    %c0_i32 = arith.constant 0 : i32
    %0 = arith.cmpi eq, %arg2, %c0_i32 : i32
    %1 = arith.extui %0 : i1 to i32
    %c0_i32_0 = arith.constant 0 : i32
    %2 = arith.cmpi ne, %1, %c0_i32_0 : i32
    scf.if %2 {
      %cst_9 = arith.constant 0.000000e+00 : f32
      %12 = vector.broadcast %cst_9 : f32 to vector<16x128xf32>
      %c0_10 = arith.constant 0 : index
      %c0_11 = arith.constant 0 : index
      %13 = vector.load %arg6[%c0_10, %c0_11] : memref<16x128xf32, #tpu.memory_space<vmem>>, vector<16x128xf32>
      tpu.vector_store %arg6[%c0_10, %c0_11], %12 {strides = array<i32>} : memref<16x128xf32, #tpu.memory_space<vmem>>, vector<16x128xf32>,
    } else {
    }
    %c0 = arith.constant 0 : index
    %c0_1 = arith.constant 0 : index
    %3 = vector.load %arg6[%c0, %c0_1] : memref<16x128xf32, #tpu.memory_space<vmem>>, vector<16x128xf32>
    %c0_2 = arith.constant 0 : index
    %c0_3 = arith.constant 0 : index
    %4 = vector.load %arg3[%c0_2, %c0_3] : memref<16x128xf32, #tpu.memory_space<vmem>>, vector<16x128xf32>
    %c0_4 = arith.constant 0 : index
    %c0_5 = arith.constant 0 : index
    %5 = vector.load %arg4[%c0_4, %c0_5] : memref<128x128xf32, #tpu.memory_space<vmem>>, vector<128x128xf32>
    %cst = arith.constant dense<0.000000e+00> : vector<16x128xf32>
    %6 = tpu.matmul %4, %5, %cst {dimension_numbers = #tpu.dot_dimension_numbers<[1], [1], [0], [0], [0, 0, 1, 0], [], []>} : vector<16x128xf32>, vector<128x128xf32>, vector<16x128xf32> -> vector<16x128xf32>
    %7 = arith.addf %3, %6 : vector<16x128xf32>
    %c0_6 = arith.constant 0 : index
    %c0_7 = arith.constant 0 : index
    %8 = vector.load %arg6[%c0_6, %c0_7] : memref<16x128xf32, #tpu.memory_space<vmem>>, vector<16x128xf32>
    tpu.vector_store %arg6[%c0_6, %c0_7], %7 {strides = array<i32>} : memref<16x128xf32, #tpu.memory_space<vmem>>, vector<16x128xf32>,
    %c1_i32 = arith.constant 1 : i32
    %9 = arith.cmpi eq, %arg2, %c1_i32 : i32
    %10 = arith.extui %9 : i1 to i32
    %c0_i32_8 = arith.constant 0 : i32
    %11 = arith.cmpi ne, %10, %c0_i32_8 : i32
    scf.if %11 {
      %c0_9 = arith.constant 0 : index
      %c0_10 = arith.constant 0 : index
      %12 = vector.load %arg6[%c0_9, %c0_10] : memref<16x128xf32, #tpu.memory_space<vmem>>, vector<16x128xf32>
      %c0_11 = arith.constant 0 : index
      %c0_12 = arith.constant 0 : index
      %13 = vector.load %arg5[%c0_11, %c0_12] : memref<16x128xf32, #tpu.memory_space<vmem>>, vector<16x128xf32>
      tpu.vector_store %arg5[%c0_11, %c0_12], %12 {strides = array<i32>} : memref<16x128xf32, #tpu.memory_space<vmem>>, vector<16x128xf32>,
    } else {
    }
    return
  }
  func.func @transform_0(%arg0: i32, %arg1: i32, %arg2: i32) -> (i32, i32) {
    %c0_i32 = arith.constant 0 : i32
    return %arg0, %arg2 : i32, i32
  }
  func.func @transform_1(%arg0: i32, %arg1: i32, %arg2: i32) -> (i32, i32) {
    %c0_i32 = arith.constant 0 : i32
    return %arg1, %arg2 : i32, i32
  }
  func.func @transform_2(%arg0: i32, %arg1: i32, %arg2: i32) -> (i32, i32) {
    %c0_i32 = arith.constant 0 : i32
    return %arg0, %arg1 : i32, i32
  }
}

</mosaic_0001>

<llo_original>
// kernel: tpu_custom_call.1
$region0: #{tpu_custom_call.1}
  #allocation0 [shape = 'u32[]', space=smem, size = 0x4, offset = 0x4, fixed_abs, tag = 'smem constant byte address 0x4 - core index']
  #allocation1 [shape = 'u32[144,128]{1,0:T(1,128)}', space=vmem, size = 0x12000, scoped, tag = 'internal scratch']
  #allocation2 [shape = 'f32[16,128]{1,0:T(8,128)}', space=vmem, size = 0x2000, scoped, tag = 'scratch operand']
  %s0 = inlined_call_operand.hbm [shape: f32[32,256], index: 0, kind: input, shape index: {}]
  %s1 = inlined_call_operand.hbm [shape: f32[768,256], index: 1, kind: input, shape index: {}]
  %s2 = inlined_call_operand.hbm [shape: f32[32,768], index: 2, kind: output, shape index: {}]
  %s3 = sld [smem:[#allocation0]]
  $region57: #{tpu_custom_call.1} parent=0
    _
  %s5 = ssub.s32 1, %s3
  %s6 = scalar_select 0, %s5, %s3
  $region1: #{tpu_custom_call.1} parent=0
    #allocation3 [shape = 'u8[16384]{0}', space=vmem, size = 0x4000, scoped, tag = 'input window, operand 0']
    #allocation4 [shape = 's32[2]{0}', space=sflag, size = 0x8, scoped, tag = 'scoped memory for tpu_custom_call.1']
    #allocation5 [shape = 's32[2]{0}', space=sflag, size = 0x8, scoped, tag = 'scoped memory for tpu_custom_call.1']
    #allocation6 [shape = 'u8[131072]{0}', space=vmem, size = 0x20000, scoped, tag = 'input window, operand 1']
    #allocation7 [shape = 's32[2]{0}', space=sflag, size = 0x8, scoped, tag = 'scoped memory for tpu_custom_call.1']
    #allocation8 [shape = 'u8[16384]{0}', space=vmem, size = 0x4000, scoped, tag = 'output window, operand 0']
    %7 = vsyncpa [#allocation4], 0
    %s8 = scalar_lea.sflag [#allocation4], 1
    %9 = vsyncpa %s8, 0
    %10 = vsyncpa [#allocation7], 0
    %s11 = scalar_lea.sflag [#allocation7], 1
    %12 = vsyncpa %s11, 0
    %13 = vsyncpa [#allocation5], 0
    %s14 = scalar_lea.sflag [#allocation5], 1
    %15 = vsyncpa %s14, 0
    loop: start=0, step=1, limit=26
    $region2: #{tpu_custom_call.1} parent=1 // loop_pre_header
      _
    $region3: #{tpu_custom_call.1} parent=1 // loop_header
      %s17 = sphi 0, %s21
      %p18 = scmp.ge.s32.totalorder %s17, 26
      %s24 = sphi 0, %s43
      %s25 = sphi 0, %s39
      %s26 = sphi 0, %s35
      %s27 = sphi 0, %s24
      %s28 = sphi 0, %s25
      %s29 = sphi 0, %s26
      %s30 = sphi 0, %s27
      %s31 = sphi 0, %s28
      %s32 = sphi 0, %s29
      %s48 = sphi 0, %s50
      %s51 = sphi 0, %s48
      %s52 = sphi 0, %s51
      %s68 = sphi 0, %s52
      %s76 = sphi 0, %s78
      %s79 = sphi 0, %s76
      %s80 = sphi 0, %s79
      %s96 = sphi 0, %s80
      %s104 = sphi 0, %s106
      %s107 = sphi 0, %s104
      %s108 = sphi 0, %s107
      %s124 = sphi 0, %s108
    $region4: #{tpu_custom_call.1} parent=1 // loop_header_branch
      %20 = sbr.rel (%p18) target = $region8
    $region5: #{tpu_custom_call.1} parent=1 // loop_body
      %s22 = ssub.s32 %s17, 1
      %s23 = ssub.s32 %s17, 2
      %s33 = sadd.s32 1, %s26
      %p34 = scmp.ge.s32.totalorder %s33, 2
      %s35 = scalar_select %p34, 0, %s33
      %s36 = sadd.s32 1, %s25
      %s37 = scalar_select %p34, %s36, %s25
      %p38 = scmp.ge.s32.totalorder %s37, 6
      %s39 = scalar_select %p38, 0, %s37
      %s40 = sadd.s32 1, %s24
      %s41 = scalar_select %p38, %s40, %s24
      %p42 = scmp.ge.s32.totalorder %s41, 2
      %s43 = scalar_select %p42, 0, %s41
      %s44 = ssub.s32 %s24, %s43
      %s45 = ssub.s32 %s26, %s35
      %s46 = sor.u32 %s44, %s45
      %p47 = scmp.eq.s32.totalorder %s46, 0
      %s49 = sadd.s32 %s48, 1
      %s50 = scalar_select %p47, %s48, %s49
      %p53 = pneg %p47
      %p54 = scmp.eq.s32.totalorder %s17, 23
      %p55 = por %p53, %p54
      %p56 = scmp.ne.s32.totalorder %s48, %s51
      %p57 = scmp.eq.s32.totalorder %s17, 0
      %p58 = por %p56, %p57
      %p59 = scmp.ne.s32.totalorder %s48, %s51
      %p60 = scmp.eq.s32.totalorder %s22, 23
      %p61 = por %p59, %p60
      %p62 = scmp.ne.s32.totalorder %s51, %s52
      %p63 = scmp.eq.s32.totalorder %s22, 0
      %p64 = por %p62, %p63
      %p65 = scmp.ne.s32.totalorder %s51, %s52
      %p66 = scmp.eq.s32.totalorder %s23, 23
      %p67 = por %p65, %p66
      %p69 = scmp.ne.s32.totalorder %s52, %s68
      %p70 = scmp.eq.s32.totalorder %s23, 0
      %p71 = por %p69, %p70
      %s72 = ssub.s32 %s25, %s39
      %s73 = ssub.s32 %s26, %s35
      %s74 = sor.u32 %s72, %s73
      %p75 = scmp.eq.s32.totalorder %s74, 0
      %s77 = sadd.s32 %s76, 1
      %s78 = scalar_select %p75, %s76, %s77
      %p81 = pneg %p75
      %p82 = scmp.eq.s32.totalorder %s17, 23
      %p83 = por %p81, %p82
      %p84 = scmp.ne.s32.totalorder %s76, %s79
      %p85 = scmp.eq.s32.totalorder %s17, 0
      %p86 = por %p84, %p85
      %p87 = scmp.ne.s32.totalorder %s76, %s79
      %p88 = scmp.eq.s32.totalorder %s22, 23
      %p89 = por %p87, %p88
      %p90 = scmp.ne.s32.totalorder %s79, %s80
      %p91 = scmp.eq.s32.totalorder %s22, 0
      %p92 = por %p90, %p91
      %p93 = scmp.ne.s32.totalorder %s79, %s80
      %p94 = scmp.eq.s32.totalorder %s23, 23
      %p95 = por %p93, %p94
      %p97 = scmp.ne.s32.totalorder %s80, %s96
      %p98 = scmp.eq.s32.totalorder %s23, 0
      %p99 = por %p97, %p98
      %s100 = ssub.s32 %s24, %s43
      %s101 = ssub.s32 %s25, %s39
      %s102 = sor.u32 %s100, %s101
      %p103 = scmp.eq.s32.totalorder %s102, 0
      %s105 = sadd.s32 %s104, 1
      %s106 = scalar_select %p103, %s104, %s105
      %p109 = pneg %p103
      %p110 = scmp.eq.s32.totalorder %s17, 23
      %p111 = por %p109, %p110
      %p112 = scmp.ne.s32.totalorder %s104, %s107
      %p113 = scmp.eq.s32.totalorder %s17, 0
      %p114 = por %p112, %p113
      %p115 = scmp.ne.s32.totalorder %s104, %s107
      %p116 = scmp.eq.s32.totalorder %s22, 23
      %p117 = por %p115, %p116
      %p118 = scmp.ne.s32.totalorder %s107, %s108
      %p119 = scmp.eq.s32.totalorder %s22, 0
      %p120 = por %p118, %p119
      %p121 = scmp.ne.s32.totalorder %s107, %s108
      %p122 = scmp.eq.s32.totalorder %s23, 23
      %p123 = por %p121, %p122
      %p125 = scmp.ne.s32.totalorder %s108, %s124
      %p126 = scmp.eq.s32.totalorder %s23, 0
      %p127 = por %p125, %p126
      %p128 = scmp.le.s32.totalorder 1, %s17
      %p129 = scmp.lt.s32.totalorder %s17, 25
      %p130 = pnand %p128, %p129
      %p131 = pneg %p130
      // Predicated region
      $region9: #{tpu_custom_call.1} parent=5 // pred_check
        _
      $region10: #{tpu_custom_call.1} parent=5 // pred_check_branch
        %133 = sbr.rel (%p130) target = $region12
      $region11: #{tpu_custom_call.1} parent=5 // pred_region
        %s134 = ssub.s32 %s17, 1
      $region12: #{tpu_custom_call.1} parent=5 // pred_fallthru
        _
      %p135 = scmp.lt.s32.totalorder %s17, 24
      // Predicated region
      $region13: #{tpu_custom_call.1} parent=5 // pred_check
        %p136 = pneg %p135
      $region14: #{tpu_custom_call.1} parent=5 // pred_check_branch
        %138 = sbr.rel (%p136) target = $region16
      $region15: #{tpu_custom_call.1} parent=5 // pred_region
        // Predicated region
        $region17: #{tpu_custom_call.1} parent=15 // pred_check
          %p139 = pneg %p58
        $region18: #{tpu_custom_call.1} parent=15 // pred_check_branch
          %141 = sbr.rel (%p139) target = $region20
        $region19: #{tpu_custom_call.1} parent=15 // pred_region
          %s142 = sand.u32 %s48, 1
          %s143 = scalar_lea.sflag [#allocation4], %s142
          %s144 = sand.u32 %s48, 1
          %s145 = smul.addr %s144, 16
          %s146 = scalar_lea.vmem [#allocation3], %s145
          %s147 = smul.u32 2, %s24
          %s149 = ssub.s32 256, 256
          %150 = vsyncadd %s143, %s149
          %s151 = smul.addr %s147, 2
          %s152 = sadd.s32 %s26, %s151
          %s153 = smul.addr %s152, 128
          %s154 = scalar_lea.hbm %s0, %s153
          %s155 = sshll.u32 %s146, 4
          %s156 = int_to_ptr.vmem [resolvable:$true] %s155
          %161 = dma.hbm_to_vmem [thread:$0]  %s154, 256, %s156, %s143, 256, 128, 8
        $region20: #{tpu_custom_call.1} parent=15 // pred_fallthru
          _
        // Predicated region
        $region21: #{tpu_custom_call.1} parent=15 // pred_check
          %p162 = pneg %p86
        $region22: #{tpu_custom_call.1} parent=15 // pred_check_branch
          %164 = sbr.rel (%p162) target = $region24
        $region23: #{tpu_custom_call.1} parent=15 // pred_region
          %s165 = sand.u32 %s76, 1
          %s166 = scalar_lea.sflag [#allocation7], %s165
          %s167 = sand.u32 %s76, 1
          %s168 = smul.addr %s167, 128
          %s169 = scalar_lea.vmem [#allocation6], %s168
          %s170 = smul.u32 16, %s25
          %s172 = ssub.s32 2048, 2048
          %173 = vsyncadd %s166, %s172
          %s174 = smul.addr %s170, 2
          %s175 = sadd.s32 %s26, %s174
          %s176 = smul.addr %s175, 128
          %s177 = scalar_lea.hbm %s1, %s176
          %s178 = sshll.u32 %s169, 4
          %s179 = int_to_ptr.vmem [resolvable:$true] %s178
          %184 = dma.hbm_to_vmem [thread:$0]  %s177, 2048, %s179, %s166, 256, 128, 8
        $region24: #{tpu_custom_call.1} parent=15 // pred_fallthru
          _
      $region16: #{tpu_custom_call.1} parent=5 // pred_fallthru
        _
      %p185 = scmp.le.s32.totalorder 1, %s17
      %p186 = scmp.lt.s32.totalorder %s17, 25
      %p187 = pnand %p185, %p186
      %p188 = pneg %p187
      // Predicated region
      $region25: #{tpu_custom_call.1} parent=5 // pred_check
        _
      $region26: #{tpu_custom_call.1} parent=5 // pred_check_branch
        %190 = sbr.rel (%p187) target = $region28
      $region27: #{tpu_custom_call.1} parent=5 // pred_region
        %s191 = ssub.s32 %s17, 1
        %s192 = sand.u32 %s51, 1
        %s193 = scalar_lea.sflag [#allocation4], %s192
        %s194 = sand.u32 %s51, 1
        %s195 = smul.addr %s194, 16
        %s196 = scalar_lea.vmem [#allocation3], %s195
        // Predicated region
        $region29: #{tpu_custom_call.1} parent=27 // pred_check
          %p197 = pneg %p64
        $region30: #{tpu_custom_call.1} parent=27 // pred_check_branch
          %199 = sbr.rel (%p197) target = $region32
        $region31: #{tpu_custom_call.1} parent=27 // pred_region
          %200 = dma.done %s193, 256
        $region32: #{tpu_custom_call.1} parent=27 // pred_fallthru
          _
        %s201 = sand.u32 %s79, 1
        %s202 = scalar_lea.sflag [#allocation7], %s201
        %s203 = sand.u32 %s79, 1
        %s204 = smul.addr %s203, 128
        %s205 = scalar_lea.vmem [#allocation6], %s204
        // Predicated region
        $region33: #{tpu_custom_call.1} parent=27 // pred_check
          %p206 = pneg %p92
        $region34: #{tpu_custom_call.1} parent=27 // pred_check_branch
          %208 = sbr.rel (%p206) target = $region36
        $region35: #{tpu_custom_call.1} parent=27 // pred_region
          %209 = dma.done %s202, 2048
        $region36: #{tpu_custom_call.1} parent=27 // pred_fallthru
          _
        %s210 = sand.u32 %s51, 1
        %s211 = scalar_lea.sflag [#allocation4], %s210
        %s212 = sand.u32 %s51, 1
        %s213 = smul.addr %s212, 16
        %s214 = scalar_lea.vmem [#allocation3], %s213
        %p215 = pneg %p64
        %p216 = pneg %p61
        %s217 = sand.u32 %s79, 1
        %s218 = scalar_lea.sflag [#allocation7], %s217
        %s219 = sand.u32 %s79, 1
        %s220 = smul.addr %s219, 128
        %s221 = scalar_lea.vmem [#allocation6], %s220
        %p222 = pneg %p92
        %p223 = pneg %p89
        %p224 = pneg %p120
        %p225 = pneg %p117
        %s226 = sand.u32 %s107, 1
        %s227 = scalar_lea.sflag [#allocation5], %s226
        %s228 = sand.u32 %s107, 1
        %s229 = smul.addr %s228, 16
        %s230 = scalar_lea.vmem [#allocation8], %s229
        %s231 = smul.u32 2, %s27
        %s232 = smul.u32 16, %s28
        %s233 = smul.u32 2, %s27
        %p234 = scmp.eq.s32.totalorder %s29, 0
        // Predicated region
        $region37: #{tpu_custom_call.1} parent=27 // pred_check
          %p235 = pneg %p234
        $region38: #{tpu_custom_call.1} parent=27 // pred_check_branch
          %237 = sbr.rel (%p235) target = $region40
        $region39: #{tpu_custom_call.1} parent=27 // pred_region
          %238 = vst [vmem:[#allocation2] sm:$0xff] 0.0
          %239 = vst [vmem:[#allocation2 + $0x8] sm:$0xff] 0.0
        $region40: #{tpu_custom_call.1} parent=27 // pred_fallthru
          _
        %v240 = vld [vmem:[#allocation2] sm:$0xff]
        %v241 = vld [vmem:[#allocation2 + $0x8] sm:$0xff]
        %v242 = vld [vmem:[%s196] sm:$0xff]
        %v243 = vld [vmem:[%s196 + $0x8] sm:$0xff]
        %v244 = vld [vmem:[%s205] sm:$0xff]
        %v245 = vld [vmem:[%s205 + $0x8] sm:$0xff]
        %v246 = vld [vmem:[%s205 + $0x10] sm:$0xff]
        %v247 = vld [vmem:[%s205 + $0x18] sm:$0xff]
        %v248 = vld [vmem:[%s205 + $0x20] sm:$0xff]
        %v249 = vld [vmem:[%s205 + $0x28] sm:$0xff]
        %v250 = vld [vmem:[%s205 + $0x30] sm:$0xff]
        %v251 = vld [vmem:[%s205 + $0x38] sm:$0xff]
        %v252 = vld [vmem:[%s205 + $0x40] sm:$0xff]
        %v253 = vld [vmem:[%s205 + $0x48] sm:$0xff]
        %v254 = vld [vmem:[%s205 + $0x50] sm:$0xff]
        %v255 = vld [vmem:[%s205 + $0x58] sm:$0xff]
        %v256 = vld [vmem:[%s205 + $0x60] sm:$0xff]
        %v257 = vld [vmem:[%s205 + $0x68] sm:$0xff]
        %v258 = vld [vmem:[%s205 + $0x70] sm:$0xff]
        %v259 = vld [vmem:[%s205 + $0x78] sm:$0xff]
        %260 = vmatprep.subr.mxu0 0.0
        %261 = vmatpush1.xpose.msra.mxu0 %v259
        %262 = vmatprep.subr.mxu0 0.0
        %263 = vmatpush1.xpose.msra.mxu0 %v258
        %264 = vmatprep.subr.mxu0 0.0
        %265 = vmatpush1.xpose.msra.mxu0 %v257
        %266 = vmatprep.subr.mxu0 0.0
        %267 = vmatpush1.xpose.msra.mxu0 %v256
        %268 = vmatprep.subr.mxu0 0.0
        %269 = vmatpush1.xpose.msra.mxu0 %v255
        %270 = vmatprep.subr.mxu0 0.0
        %271 = vmatpush1.xpose.msra.mxu0 %v254
        %272 = vmatprep.subr.mxu0 0.0
        %273 = vmatpush1.xpose.msra.mxu0 %v253
        %274 = vmatprep.subr.mxu0 0.0
        %275 = vmatpush1.xpose.msra.mxu0 %v252
        %276 = vmatprep.subr.mxu0 0.0
        %277 = vmatpush1.xpose.msra.mxu0 %v251
        %278 = vmatprep.subr.mxu0 0.0
        %279 = vmatpush1.xpose.msra.mxu0 %v250
        %280 = vmatprep.subr.mxu0 0.0
        %281 = vmatpush1.xpose.msra.mxu0 %v249
        %282 = vmatprep.subr.mxu0 0.0
        %283 = vmatpush1.xpose.msra.mxu0 %v248
        %284 = vmatprep.subr.mxu0 0.0
        %285 = vmatpush1.xpose.msra.mxu0 %v247
        %286 = vmatprep.subr.mxu0 0.0
        %287 = vmatpush1.xpose.msra.mxu0 %v246
        %288 = vmatprep.subr.mxu0 0.0
        %289 = vmatpush1.xpose.msra.mxu0 %v245
        %290 = vmatprep.subr.mxu0 0.0
        %291 = vmatpush1.xpose.msra.mxu0 %v244
        %292 = vmatprep.subr.mxu0 0.0
        %293 = vmatpush2.xpose.msra.mxu0 0.0
        %294 = vmatprep.subr.mxu0 0.0
        %295 = vmatpush2.xpose.msra.mxu0 0.0
        %296 = vmatprep.subr.mxu0 0.0
        %297 = vmatpush2.xpose.msra.mxu0 0.0
        %298 = vmatprep.subr.mxu0 0.0
        %299 = vmatpush2.xpose.msra.mxu0 0.0
        %300 = vmatprep.subr.mxu0 0.0
        %301 = vmatpush2.xpose.msra.mxu0 0.0
        %302 = vmatprep.subr.mxu0 0.0
        %303 = vmatpush2.xpose.msra.mxu0 0.0
        %304 = vmatprep.subr.mxu0 0.0
        %305 = vmatpush2.xpose.msra.mxu0 0.0
        %306 = vmatprep.subr.mxu0 0.0
        %307 = vmatpush2.xpose.msra.mxu0 0.0
        %308 = vmatprep.subr.mxu0 0.0
        %309 = vmatpush2.xpose.msra.mxu0 0.0
        %310 = vmatprep.subr.mxu0 0.0
        %311 = vmatpush2.xpose.msra.mxu0 0.0
        %312 = vmatprep.subr.mxu0 0.0
        %313 = vmatpush2.xpose.msra.mxu0 0.0
        %314 = vmatprep.subr.mxu0 0.0
        %315 = vmatpush2.xpose.msra.mxu0 0.0
        %316 = vmatprep.subr.mxu0 0.0
        %317 = vmatpush2.xpose.msra.mxu0 0.0
        %318 = vmatprep.subr.mxu0 0.0
        %319 = vmatpush2.xpose.msra.mxu0 0.0
        %320 = vmatprep.subr.mxu0 0.0
        %321 = vmatpush2.xpose.msra.mxu0 0.0
        %322 = vmatprep.subr.mxu0 0.0
        %323 = vmatpush2.xpose.msra.mxu0 0.0
        %324 = vmatprep.mubr.f32.mxu0 0.0
        %325 = vmatmul.mubr.f32.gmra.mxu0 %v242
        %v326 = vpop.f32.mrf.mxu0
        %v327 = vadd.f32 0.0, %v326
        %v328 = vpop.f32.mrf.mxu0
        %329 = vmatprep.mubr.f32.mxu0 0.0
        %330 = vmatmul.mubr.f32.gmra.mxu0 %v243
        %v331 = vpop.f32.mrf.mxu0
        %v332 = vadd.f32 0.0, %v331
        %v333 = vpop.f32.mrf.mxu0
        %334 = vdwg.mxu0
        %v335 = vadd.f32 %v240, %v327
        %v336 = vadd.f32 %v241, %v332
        %337 = vst [vmem:[#allocation2] sm:$0xff] %v335
        %338 = vst [vmem:[#allocation2 + $0x8] sm:$0xff] %v336
        %p339 = scmp.eq.s32.totalorder %s29, 1
        // Predicated region
        $region41: #{tpu_custom_call.1} parent=27 // pred_check
          %p340 = pneg %p339
        $region42: #{tpu_custom_call.1} parent=27 // pred_check_branch
          %342 = sbr.rel (%p340) target = $region44
        $region43: #{tpu_custom_call.1} parent=27 // pred_region
          %v343 = vld [vmem:[#allocation2] sm:$0xff]
          %v344 = vld [vmem:[#allocation2 + $0x8] sm:$0xff]
          %345 = vst [vmem:[%s230] sm:$0xff] %v343
          %346 = vst [vmem:[%s230 + $0x8] sm:$0xff] %v344
        $region44: #{tpu_custom_call.1} parent=27 // pred_fallthru
          _
        %s347 = sand.u32 %s107, 1
        %s348 = scalar_lea.sflag [#allocation5], %s347
        %s349 = sand.u32 %s107, 1
        %s350 = smul.addr %s349, 16
        %s351 = scalar_lea.vmem [#allocation8], %s350
        // Predicated region
        $region45: #{tpu_custom_call.1} parent=27 // pred_check
          %p352 = pneg %p117
        $region46: #{tpu_custom_call.1} parent=27 // pred_check_branch
          %354 = sbr.rel (%p352) target = $region48
        $region47: #{tpu_custom_call.1} parent=27 // pred_region
          %s355 = smul.u32 2, %s27
          %s357 = ssub.s32 256, 256
          %358 = vsyncadd %s348, %s357
          %s359 = smul.addr %s355, 6
          %s360 = sadd.s32 %s28, %s359
          %s361 = smul.addr %s360, 128
          %s362 = scalar_lea.hbm %s2, %s361
          %s363 = sshll.u32 %s351, 4
          %s364 = int_to_ptr.vmem [resolvable:$true] %s363
          %369 = dma.vmem_to_hbm [thread:$0]  %s364, 256, %s362, %s348, 128, 768, 8
        $region48: #{tpu_custom_call.1} parent=27 // pred_fallthru
          _
      $region28: #{tpu_custom_call.1} parent=5 // pred_fallthru
        _
      %p370 = scmp.le.s32.totalorder 2, %s17
      // Predicated region
      $region49: #{tpu_custom_call.1} parent=5 // pred_check
        %p371 = pneg %p370
      $region50: #{tpu_custom_call.1} parent=5 // pred_check_branch
        %373 = sbr.rel (%p371) target = $region52
      $region51: #{tpu_custom_call.1} parent=5 // pred_region
        %s374 = ssub.s32 %s17, 2
        // Predicated region
        $region53: #{tpu_custom_call.1} parent=51 // pred_check
          %p375 = pneg %p123
        $region54: #{tpu_custom_call.1} parent=51 // pred_check_branch
          %377 = sbr.rel (%p375) target = $region56
        $region55: #{tpu_custom_call.1} parent=51 // pred_region
          %s378 = sand.u32 %s108, 1
          %s379 = scalar_lea.sflag [#allocation5], %s378
          %s380 = sand.u32 %s108, 1
          %s381 = smul.addr %s380, 16
          %s382 = scalar_lea.vmem [#allocation8], %s381
          %383 = dma.done %s379, 256
        $region56: #{tpu_custom_call.1} parent=51 // pred_fallthru
          _
      $region52: #{tpu_custom_call.1} parent=5 // pred_fallthru
        _
    $region6: #{tpu_custom_call.1} parent=1 // loop_footer
      %s21 = sadd.s32 1, %s17
    $region7: #{tpu_custom_call.1} parent=1 // loop_footer_branch
      %16 = sbr.rel target = $region3
    $region8: #{tpu_custom_call.1} parent=1 // loop_exit
      _
    %384 = vsyncpa [#allocation4], 1
    %s385 = scalar_lea.sflag [#allocation4], 1
    %386 = vsyncpa %s385, 1
    %387 = vsyncpa [#allocation7], 1
    %s388 = scalar_lea.sflag [#allocation7], 1
    %389 = vsyncpa %s388, 1
    %390 = vsyncpa [#allocation5], 1
    %s391 = scalar_lea.sflag [#allocation5], 1
    %392 = vsyncpa %s391, 1

</llo_original>
